<compile_context>
chip_gen: v6e
topology: v6e:2x2x1
jax: 0.10.0
libtpu: 0.0.40
codegen_flags: <defaults>
</compile_context>

<pallas_src>
import math

import jax
import jax.numpy as jnp
import numpy as np
from jax import lax
from jax.experimental import pallas as pl
from jax.experimental.pallas import tpu as pltpu


# -----------------------------------------------------------------------------------------
# In-kernel helpers
# -----------------------------------------------------------------------------------------
def _conv_slab(xa_ref, xb_ref, w0_ref, w1_ref, w2_ref, w3_ref):
    """Stride-2 transposed-conv phase slab for one row tile.

    xa_ref: (TH, W+1, Cin) rows i   of the zero-padded input (bf16)
    xb_ref: (TH, W+1, Cin) rows i+1 of the zero-padded input (bf16)
    w*_ref: (Cin, 4*Cout)  block-structured per-shift weights, phase columns [ee|eo|oe|oo]
            (zeros where a kernel tap does not contribute).

    Returns the un-normalized conv output as one lane-dense (TH*W, 4*Cout) f32 slab:
      ee -> out[2i,2j], eo -> out[2i,2j+1], oe -> out[2i+1,2j], oo -> out[2i+1,2j+1].
    """
    th, wp1, cin = xa_ref.shape
    w = wp1 - 1
    m = th * w

    # Each shifted view is built exactly once per invocation and reused.
    x00 = xa_ref[:, 0:w, :].reshape(m, cin)       # x[i,   j  ]
    x01 = xa_ref[:, 1:wp1, :].reshape(m, cin)     # x[i,   j+1]
    x10 = xb_ref[:, 0:w, :].reshape(m, cin)       # x[i+1, j  ]
    x11 = xb_ref[:, 1:wp1, :].reshape(m, cin)     # x[i+1, j+1]

    def mm(x, w_ref):
        return jnp.dot(x, w_ref[...], preferred_element_type=jnp.float32)

    # 4 wide MXU pushes, f32 accumulation; no K-axis or output concatenation.
    return mm(x00, w0_ref) + mm(x01, w1_ref) + mm(x10, w2_ref) + mm(x11, w3_ref)


def _stats_kernel(xa_ref, xb_ref, w0_ref, w1_ref, w2_ref, w3_ref, stats_ref):
    """Pass 1: per-tile (mean, centered sum-of-squares) of the conv slab (Chan-combinable)."""
    y = _conv_slab(xa_ref, xb_ref, w0_ref, w1_ref, w2_ref, w3_ref)     # (m, 4*Cout) f32
    m = y.shape[0]
    mu = jnp.sum(y, axis=0, keepdims=True) * (1.0 / m)                 # (1, 4*Cout)
    yc = y - mu
    m2 = jnp.sum(yc * yc, axis=0, keepdims=True)                       # (1, 4*Cout)
    stats = jnp.concatenate([mu, m2], axis=1)                          # (1, 8*Cout)
    stats_ref[...] = jnp.broadcast_to(stats, stats_ref.shape)


def _apply_kernel(xa_ref, xb_ref, w0_ref, w1_ref, w2_ref, w3_ref,
                  scale_ref, shift_ref, out_ref):
    """Pass 2: recompute the conv slab, fused BN scale/shift + ReLU, bf16 lane-slab write."""
    y = _conv_slab(xa_ref, xb_ref, w0_ref, w1_ref, w2_ref, w3_ref)     # (m, 4*Cout) f32
    y = jnp.maximum(y * scale_ref[...] + shift_ref[...], 0.0)          # one FMA + ReLU
    out_ref[...] = y.astype(out_ref.dtype)


# -----------------------------------------------------------------------------------------
# Host-side wrapper
# -----------------------------------------------------------------------------------------
def _pick_tile_rows(total_rows, w, target_m=2048):
    """Largest divisor-of-R row tile with th*W <= target_m spatial positions, satisfying the
    (8, *) sublane constraint of the output block, preferring >= 2 grid steps (megacore)."""
    cands = [th for th in range(1, total_rows + 1)
             if total_rows % th == 0 and ((th * w) % 8 == 0 or th == total_rows)]
    fit2 = [th for th in cands if th * w <= target_m and total_rows // th >= 2]
    if fit2:
        return max(fit2)
    fit1 = [th for th in cands if th * w <= target_m]
    if fit1:
        return max(fit1)
    return min(cands)


def _vmem_limit_bytes():
    """~3/4 of physical per-core VMEM, capped at 96 MiB (=> ~96 MiB v5e/v6e, ~48 MiB v7x)."""
    try:
        cap = int(pltpu.get_tpu_info().vmem_capacity_bytes)
        return int(min(96 * 1024 * 1024, (3 * cap) // 4))
    except Exception:
        return 64 * 1024 * 1024


def upsampler_block(x, weight, bias, gamma, beta, eps=1e-3, tile_rows=None,
                    compute_dtype=jnp.bfloat16):
    """x: (N, Cin, H, W) NCHW; weight: (Cin, Cout, 3, 3) (PyTorch ConvTranspose2d layout).

    `bias` is accepted for API parity but unused: a per-channel constant added before
    training-mode BatchNorm is cancelled exactly by the batch-mean subtraction.
    """
    del bias
    N, Cin, H, W = x.shape
    Cout = weight.shape[1]
    C4 = 4 * Cout
    R = N * H            # flattened (n, i) input rows
    M = R * W            # spatial positions per output phase

    # ---- host-side layout prep (cheap, fused by XLA) --------------------------------------
    x_nhwc = jnp.transpose(x, (0, 2, 3, 1))
    xp = jnp.pad(x_nhwc, ((0, 0), (0, 1), (0, 1), (0, 0)))              # (N, H+1, W+1, Cin)
    xa = xp[:, :H].reshape(R, W + 1, Cin).astype(compute_dtype)         # rows i
    xb = xp[:, 1:].reshape(R, W + 1, Cin).astype(compute_dtype)         # rows i+1 (zero pad row)

    # Block-structured per-shift weights (phase columns [ee|eo|oe|oo]; 9/16 tap blocks used).
    w9 = jnp.transpose(weight, (2, 3, 0, 1)).reshape(9, Cin, Cout)      # index = ky*3 + kx
    z = jnp.zeros((Cin, Cout), weight.dtype)
    w0 = jnp.concatenate([w9[4], w9[5], w9[7], w9[8]], axis=1)          # for x[i,   j  ]
    w1 = jnp.concatenate([z,     w9[3], z,     w9[6]], axis=1)          # for x[i,   j+1]
    w2 = jnp.concatenate([z,     z,     w9[1], w9[2]], axis=1)          # for x[i+1, j  ]
    w3 = jnp.concatenate([z,     z,     z,     w9[0]], axis=1)          # for x[i+1, j+1]
    w0, w1, w2, w3 = (wk.astype(compute_dtype) for wk in (w0, w1, w2, w3))

    th = tile_rows if tile_rows is not None else _pick_tile_rows(R, W)
    if R % th != 0 or ((th * W) % 8 != 0 and th != R):
        raise ValueError(f"tile_rows={th} must divide N*H={R} and satisfy (th*W) % 8 == 0")
    T = R // th

    cparams = pltpu.CompilerParams(
        dimension_semantics=("parallel",),
        vmem_limit_bytes=_vmem_limit_bytes(),
    )

    x_spec = pl.BlockSpec((th, W + 1, Cin), lambda t: (t, 0, 0))
    w_spec = pl.BlockSpec((Cin, C4), lambda t: (0, 0))                  # constant -> resident

    # ---- pass 1: per-tile partial BN statistics --------------------------------------------
    stats = pl.pallas_call(
        _stats_kernel,
        grid=(T,),
        in_specs=[x_spec, x_spec, w_spec, w_spec, w_spec, w_spec],
        out_specs=pl.BlockSpec((8, 2 * C4), lambda t: (t, 0)),
        out_shape=jax.ShapeDtypeStruct((T * 8, 2 * C4), jnp.float32),
        compiler_params=cparams,
    )(xa, xb, w0, w1, w2, w3)

    # Chan combine of per-(tile, phase) groups (all groups have th*W elements).
    part = stats.reshape(T, 8, 2 * C4)[:, 0, :]                          # (T, 8*Cout)
    mu_g = part[:, :C4].reshape(T * 4, Cout)                             # group means
    m2_g = part[:, C4:].reshape(T * 4, Cout)                             # group centered SSQ
    n_g = float(th * W)
    mean = jnp.mean(mu_g, axis=0)
    m2 = jnp.sum(m2_g, axis=0) + n_g * jnp.sum((mu_g - mean) ** 2, axis=0)
    var = jnp.maximum(m2 / (4.0 * T * n_g), 0.0)                         # biased (BN training)
    scale = gamma.astype(jnp.float32) * lax.rsqrt(var + eps)
    shift = beta.astype(jnp.float32) - mean * scale
    scale4 = jnp.tile(scale, 4).reshape(1, C4)                           # pre-tiled -> 1 FMA
    shift4 = jnp.tile(shift, 4).reshape(1, C4)

    # ---- pass 2: recompute conv, fused BN + ReLU, bf16 lane-slab writeback ------------------
    out = pl.pallas_call(
        _apply_kernel,
        grid=(T,),
        in_specs=[x_spec, x_spec, w_spec, w_spec, w_spec, w_spec,
                  pl.BlockSpec((1, C4), lambda t: (0, 0)),
                  pl.BlockSpec((1, C4), lambda t: (0, 0))],
        out_specs=pl.BlockSpec((th * W, C4), lambda t: (t, 0)),
        out_shape=jax.ShapeDtypeStruct((M, C4), compute_dtype),
        compiler_params=cparams,
    )(xa, xb, w0, w1, w2, w3, scale4, shift4)

    # ---- single fused transpose: phase slab -> interleaved NCHW (cast fuses into it) --------
    y = out.reshape(N, H, W, 2, 2, Cout)             # (n, i, j, row_parity, col_parity, c)
    y = jnp.transpose(y, (0, 5, 1, 3, 2, 4))         # (n, c, i, row_parity, j, col_parity)
    return y.reshape(N, Cout, 2 * H, 2 * W).astype(x.dtype)


# -----------------------------------------------------------------------------------------
# Pure-JAX reference
# -----------------------------------------------------------------------------------------
def upsampler_ref(x, weight, bias, gamma, beta, eps=1e-3):
    """ConvTranspose2d via lhs-dilated conv, then training-mode BN + ReLU, f32 HIGHEST."""
    Cout = weight.shape[1]
    w_flip = jnp.flip(weight, axis=(2, 3)).transpose(1, 0, 2, 3)         # (Cout, Cin, 3, 3)
    y = lax.conv_general_dilated(
        x, w_flip, window_strides=(1, 1), padding=((1, 2), (1, 2)),
        lhs_dilation=(2, 2), dimension_numbers=("NCHW", "OIHW", "NCHW"),
        precision=lax.Precision.HIGHEST)
    y = y + bias.reshape(1, Cout, 1, 1)
    mean = jnp.mean(y, axis=(0, 2, 3), keepdims=True)
    var = jnp.var(y, axis=(0, 2, 3), keepdims=True)
    y = (y - mean) / jnp.sqrt(var + eps)
    y = y * gamma.reshape(1, Cout, 1, 1) + beta.reshape(1, Cout, 1, 1)
    return jnp.maximum(y, 0.0)


if __name__ == "__main__":
    key = jax.random.PRNGKey(0)
    kx, kw, kb, kg, kbeta = jax.random.split(key, 5)

    N, Cin, H, W = 2, 4, 16, 16
    Cout = 8

    x = jax.random.normal(kx, (N, Cin, H, W), jnp.float32)
    bound = 1.0 / math.sqrt(Cin * 3 * 3)
    weight = jax.random.uniform(kw, (Cin, Cout, 3, 3), jnp.float32, -bound, bound)
    bias = jax.random.uniform(kb, (Cout,), jnp.float32, -bound, bound)
    gamma = 1.0 + 0.1 * jax.random.normal(kg, (Cout,), jnp.float32)
    beta = 0.1 * jax.random.normal(kbeta, (Cout,), jnp.float32)

    ref = upsampler_ref(x, weight, bias, gamma, beta)

    # Explicit small tile (T = 4 grid steps) exercises the pipelined multi-tile path.
    out = jax.block_until_ready(upsampler_block(x, weight, bias, gamma, beta, tile_rows=8))
    assert out.shape == (N, Cout, 2 * H, 2 * W), out.shape
    # bf16 matmul inputs + bf16 slab writeback, f32 accumulation/BN -> tolerate a few %.
    np.testing.assert_allclose(np.asarray(out), np.asarray(ref), rtol=3e-2, atol=3e-2)

    # Auto-picked tiling (exercises _pick_tile_rows; guarantees >= 2 tiles for megacore).
    out2 = jax.block_until_ready(upsampler_block(x, weight, bias, gamma, beta))
    np.testing.assert_allclose(np.asarray(out2), np.asarray(ref), rtol=3e-2, atol=3e-2)

    print("KERNEL_OK")
</pallas_src>

<mosaic_0001>
module attributes {stable_mosaic.version = 11 : i64} {
  func.func @_stats_kernel(%arg0: i32, %arg1: memref<8x17x4xbf16, #tpu.memory_space<vmem>>, %arg2: memref<8x17x4xbf16, #tpu.memory_space<vmem>>, %arg3: memref<4x32xbf16, #tpu.memory_space<vmem>>, %arg4: memref<4x32xbf16, #tpu.memory_space<vmem>>, %arg5: memref<4x32xbf16, #tpu.memory_space<vmem>>, %arg6: memref<4x32xbf16, #tpu.memory_space<vmem>>, %arg7: memref<8x64xf32, #tpu.memory_space<vmem>>) attributes {dimension_semantics = [#tpu.dimension_semantics<parallel>], iteration_bounds = array<i64: 4>, scalar_prefetch = 0 : i64, scratch_operands = 0 : i64, tpu.core_type = #tpu.core_type<tc>, window_params = [{transform_indices = @transform_0, window_bounds = array<i64: 8, 17, 4>}, {transform_indices = @transform_1, window_bounds = array<i64: 8, 17, 4>}, {pipeline_mode = #tpu.pipeline_mode<synchronous>, transform_indices = @transform_2, window_bounds = array<i64: 4, 32>}, {pipeline_mode = #tpu.pipeline_mode<synchronous>, transform_indices = @transform_3, window_bounds = array<i64: 4, 32>}, {pipeline_mode = #tpu.pipeline_mode<synchronous>, transform_indices = @transform_4, window_bounds = array<i64: 4, 32>}, {pipeline_mode = #tpu.pipeline_mode<synchronous>, transform_indices = @transform_5, window_bounds = array<i64: 4, 32>}, {transform_indices = @transform_6, window_bounds = array<i64: 8, 64>}]} {
    %c0 = arith.constant 0 : index
    %c0_0 = arith.constant 0 : index
    %c0_1 = arith.constant 0 : index
    %0 = vector.load %arg1[%c0, %c0_0, %c0_1] : memref<8x17x4xbf16, #tpu.memory_space<vmem>>, vector<8x16x4xbf16>
    %1 = vector.shape_cast %0 : vector<8x16x4xbf16> to vector<128x4xbf16>
    %c0_2 = arith.constant 0 : index
    %c1 = arith.constant 1 : index
    %c0_3 = arith.constant 0 : index
    %2 = vector.load %arg1[%c0_2, %c1, %c0_3] : memref<8x17x4xbf16, #tpu.memory_space<vmem>>, vector<8x16x4xbf16>
    %3 = vector.shape_cast %2 : vector<8x16x4xbf16> to vector<128x4xbf16>
    %c0_4 = arith.constant 0 : index
    %c0_5 = arith.constant 0 : index
    %c0_6 = arith.constant 0 : index
    %4 = vector.load %arg2[%c0_4, %c0_5, %c0_6] : memref<8x17x4xbf16, #tpu.memory_space<vmem>>, vector<8x16x4xbf16>
    %5 = vector.shape_cast %4 : vector<8x16x4xbf16> to vector<128x4xbf16>
    %c0_7 = arith.constant 0 : index
    %c1_8 = arith.constant 1 : index
    %c0_9 = arith.constant 0 : index
    %6 = vector.load %arg2[%c0_7, %c1_8, %c0_9] : memref<8x17x4xbf16, #tpu.memory_space<vmem>>, vector<8x16x4xbf16>
    %7 = vector.shape_cast %6 : vector<8x16x4xbf16> to vector<128x4xbf16>
    %c0_10 = arith.constant 0 : index
    %c0_11 = arith.constant 0 : index
    %8 = vector.load %arg3[%c0_10, %c0_11] : memref<4x32xbf16, #tpu.memory_space<vmem>>, vector<4x32xbf16>
    %cst = arith.constant dense<0.000000e+00> : vector<128x32xf32>
    %9 = tpu.matmul %1, %8, %cst {dimension_numbers = #tpu.dot_dimension_numbers<[1], [0], [0], [1], [0, 0, 1, 1], [], []>} : vector<128x4xbf16>, vector<4x32xbf16>, vector<128x32xf32> -> vector<128x32xf32>
    %c0_12 = arith.constant 0 : index
    %c0_13 = arith.constant 0 : index
    %10 = vector.load %arg4[%c0_12, %c0_13] : memref<4x32xbf16, #tpu.memory_space<vmem>>, vector<4x32xbf16>
    %cst_14 = arith.constant dense<0.000000e+00> : vector<128x32xf32>
    %11 = tpu.matmul %3, %10, %cst_14 {dimension_numbers = #tpu.dot_dimension_numbers<[1], [0], [0], [1], [0, 0, 1, 1], [], []>} : vector<128x4xbf16>, vector<4x32xbf16>, vector<128x32xf32> -> vector<128x32xf32>
    %12 = arith.addf %9, %11 : vector<128x32xf32>
    %c0_15 = arith.constant 0 : index
    %c0_16 = arith.constant 0 : index
    %13 = vector.load %arg5[%c0_15, %c0_16] : memref<4x32xbf16, #tpu.memory_space<vmem>>, vector<4x32xbf16>
    %cst_17 = arith.constant dense<0.000000e+00> : vector<128x32xf32>
    %14 = tpu.matmul %5, %13, %cst_17 {dimension_numbers = #tpu.dot_dimension_numbers<[1], [0], [0], [1], [0, 0, 1, 1], [], []>} : vector<128x4xbf16>, vector<4x32xbf16>, vector<128x32xf32> -> vector<128x32xf32>
    %15 = arith.addf %12, %14 : vector<128x32xf32>
    %c0_18 = arith.constant 0 : index
    %c0_19 = arith.constant 0 : index
    %16 = vector.load %arg6[%c0_18, %c0_19] : memref<4x32xbf16, #tpu.memory_space<vmem>>, vector<4x32xbf16>
    %cst_20 = arith.constant dense<0.000000e+00> : vector<128x32xf32>
    %17 = tpu.matmul %7, %16, %cst_20 {dimension_numbers = #tpu.dot_dimension_numbers<[1], [0], [0], [1], [0, 0, 1, 1], [], []>} : vector<128x4xbf16>, vector<4x32xbf16>, vector<128x32xf32> -> vector<128x32xf32>
    %18 = arith.addf %15, %17 : vector<128x32xf32>
    %cst_21 = arith.constant dense<0.000000e+00> : vector<32xf32>
    %19 = vector.multi_reduction <add>, %18, %cst_21 [0] : vector<128x32xf32> to vector<32xf32>
    %20 = vector.shape_cast %19 : vector<32xf32> to vector<1x32xf32>
    %cst_22 = arith.constant 7.812500e-03 : f32
    %21 = vector.broadcast %cst_22 : f32 to vector<1x32xf32>
    %22 = arith.mulf %20, %21 : vector<1x32xf32>
    %23 = vector.broadcast %22 : vector<1x32xf32> to vector<128x32xf32>
    %24 = arith.subf %18, %23 : vector<128x32xf32>
    %25 = arith.mulf %24, %24 : vector<128x32xf32>
    %cst_23 = arith.constant dense<0.000000e+00> : vector<32xf32>
    %26 = vector.multi_reduction <add>, %25, %cst_23 [0] : vector<128x32xf32> to vector<32xf32>
    %27 = vector.shape_cast %26 : vector<32xf32> to vector<1x32xf32>
    %28 = tpu.concatenate %22, %27 in 1 : vector<1x32xf32>, vector<1x32xf32> -> vector<1x64xf32>
    %29 = vector.shape_cast %28 : vector<1x64xf32> to vector<1x64xf32>
    %30 = vector.broadcast %29 : vector<1x64xf32> to vector<8x64xf32>
    %c0_24 = arith.constant 0 : index
    %c0_25 = arith.constant 0 : index
    %31 = vector.load %arg7[%c0_24, %c0_25] : memref<8x64xf32, #tpu.memory_space<vmem>>, vector<8x64xf32>
    tpu.vector_store %arg7[%c0_24, %c0_25], %30 {strides = array<i32>} : memref<8x64xf32, #tpu.memory_space<vmem>>, vector<8x64xf32>,
    return
  }
  func.func @transform_0(%arg0: i32) -> (i32, i32, i32) {
    %c0_i32 = arith.constant 0 : i32
    %c0_i32_0 = arith.constant 0 : i32
    %c0_i32_1 = arith.constant 0 : i32
    return %arg0, %c0_i32, %c0_i32_0 : i32, i32, i32
  }
  func.func @transform_1(%arg0: i32) -> (i32, i32, i32) {
    %c0_i32 = arith.constant 0 : i32
    %c0_i32_0 = arith.constant 0 : i32
    %c0_i32_1 = arith.constant 0 : i32
    return %arg0, %c0_i32, %c0_i32_0 : i32, i32, i32
  }
  func.func @transform_2(%arg0: i32) -> (i32, i32) {
    %c0_i32 = arith.constant 0 : i32
    %c0_i32_0 = arith.constant 0 : i32
    %c0_i32_1 = arith.constant 0 : i32
    return %c0_i32, %c0_i32_0 : i32, i32
  }
  func.func @transform_3(%arg0: i32) -> (i32, i32) {
    %c0_i32 = arith.constant 0 : i32
    %c0_i32_0 = arith.constant 0 : i32
    %c0_i32_1 = arith.constant 0 : i32
    return %c0_i32, %c0_i32_0 : i32, i32
  }
  func.func @transform_4(%arg0: i32) -> (i32, i32) {
    %c0_i32 = arith.constant 0 : i32
    %c0_i32_0 = arith.constant 0 : i32
    %c0_i32_1 = arith.constant 0 : i32
    return %c0_i32, %c0_i32_0 : i32, i32
  }
  func.func @transform_5(%arg0: i32) -> (i32, i32) {
    %c0_i32 = arith.constant 0 : i32
    %c0_i32_0 = arith.constant 0 : i32
    %c0_i32_1 = arith.constant 0 : i32
    return %c0_i32, %c0_i32_0 : i32, i32
  }
  func.func @transform_6(%arg0: i32) -> (i32, i32) {
    %c0_i32 = arith.constant 0 : i32
    %c0_i32_0 = arith.constant 0 : i32
    return %arg0, %c0_i32 : i32, i32
  }
}

</mosaic_0001>

<llo_original>
// kernel: tpu_custom_call.1
$region0: #{tpu_custom_call.1}
  #allocation0 [shape = 'u32[]', space=smem, size = 0x4, offset = 0x4, fixed_abs, tag = 'smem constant byte address 0x4 - core index']
  #allocation1 [shape = 'u32[144,128]{1,0:T(1,128)}', space=vmem, size = 0x12000, scoped, tag = 'internal scratch']
  %s0 = inlined_call_operand.vmem [shape: bf16[32,17,4], index: 0, kind: input, shape index: {}]
  %s1 = inlined_call_operand.vmem [shape: bf16[32,17,4], index: 1, kind: input, shape index: {}]
  %s2 = inlined_call_operand.vmem [shape: bf16[4,32], index: 2, kind: input, shape index: {}]
  %s3 = inlined_call_operand.vmem [shape: bf16[4,32], index: 3, kind: input, shape index: {}]
  %s4 = inlined_call_operand.vmem [shape: bf16[4,32], index: 4, kind: input, shape index: {}]
  %s5 = inlined_call_operand.vmem [shape: bf16[4,32], index: 5, kind: input, shape index: {}]
  %s6 = inlined_call_operand.hbm [shape: f32[32,64], index: 6, kind: output, shape index: {}]
  %s7 = sld [smem:[#allocation0]]
  $region57: #{tpu_custom_call.1} parent=0
    _
  %s9 = ssub.s32 1, %s7
  %s10 = scalar_select 0, %s9, %s7
  $region1: #{tpu_custom_call.1} parent=0
    #allocation2 [shape = 'u8[8192]{0}', space=vmem, size = 0x2000, scoped, tag = 'output window, operand 0']
    #allocation3 [shape = 's32[2]{0}', space=sflag, size = 0x8, scoped, tag = 'scoped memory for tpu_custom_call.1']
    %11 = vsyncpa [#allocation3], 0
    %s12 = scalar_lea.sflag [#allocation3], 1
    %13 = vsyncpa %s12, 0
    loop: start=0, step=1, limit=6
    $region2: #{tpu_custom_call.1} parent=1 // loop_pre_header
      _
    $region3: #{tpu_custom_call.1} parent=1 // loop_header
      %s15 = sphi 0, %s19
      %p16 = scmp.ge.s32.totalorder %s15, 6
      %s25 = sphi 0, %s27
      %s28 = sphi 0, %s25
      %s29 = sphi 0, %s28
      %s45 = sphi 0, %s29
      %s51 = sphi 0, %s53
      %s54 = sphi 0, %s51
      %s55 = sphi 0, %s54
      %s71 = sphi 0, %s55
      %s75 = sphi 0, %s75
      %s77 = sphi 0, %s75
      %s78 = sphi 0, %s77
      %s92 = sphi 0, %s78
      %s96 = sphi 0, %s96
      %s98 = sphi 0, %s96
      %s99 = sphi 0, %s98
      %s113 = sphi 0, %s99
      %s117 = sphi 0, %s117
      %s119 = sphi 0, %s117
      %s120 = sphi 0, %s119
      %s134 = sphi 0, %s120
      %s138 = sphi 0, %s138
      %s140 = sphi 0, %s138
      %s141 = sphi 0, %s140
      %s155 = sphi 0, %s141
      %s161 = sphi 0, %s163
      %s164 = sphi 0, %s161
      %s165 = sphi 0, %s164
      %s181 = sphi 0, %s165
    $region4: #{tpu_custom_call.1} parent=1 // loop_header_branch
      %18 = sbr.rel (%p16) target = $region8
    $region5: #{tpu_custom_call.1} parent=1 // loop_body
      %s20 = ssub.s32 %s15, 1
      %s21 = ssub.s32 %s15, 2
      %s22 = sadd.s32 %s15, 1
      %s23 = ssub.s32 %s15, %s22
      %p24 = scmp.eq.s32.totalorder %s23, 0
      %s26 = sadd.s32 %s25, 1
      %s27 = scalar_select %p24, %s25, %s26
      %p30 = pneg %p24
      %p31 = scmp.eq.s32.totalorder %s15, 3
      %p32 = por %p30, %p31
      %p33 = scmp.ne.s32.totalorder %s25, %s28
      %p34 = scmp.eq.s32.totalorder %s15, 0
      %p35 = por %p33, %p34
      %p36 = scmp.ne.s32.totalorder %s25, %s28
      %p37 = scmp.eq.s32.totalorder %s20, 3
      %p38 = por %p36, %p37
      %p39 = scmp.ne.s32.totalorder %s28, %s29
      %p40 = scmp.eq.s32.totalorder %s20, 0
      %p41 = por %p39, %p40
      %p42 = scmp.ne.s32.totalorder %s28, %s29
      %p43 = scmp.eq.s32.totalorder %s21, 3
      %p44 = por %p42, %p43
      %p46 = scmp.ne.s32.totalorder %s29, %s45
      %p47 = scmp.eq.s32.totalorder %s21, 0
      %p48 = por %p46, %p47
      %s49 = ssub.s32 %s15, %s22
      %p50 = scmp.eq.s32.totalorder %s49, 0
      %s52 = sadd.s32 %s51, 1
      %s53 = scalar_select %p50, %s51, %s52
      %p56 = pneg %p50
      %p57 = scmp.eq.s32.totalorder %s15, 3
      %p58 = por %p56, %p57
      %p59 = scmp.ne.s32.totalorder %s51, %s54
      %p60 = scmp.eq.s32.totalorder %s15, 0
      %p61 = por %p59, %p60
      %p62 = scmp.ne.s32.totalorder %s51, %s54
      %p63 = scmp.eq.s32.totalorder %s20, 3
      %p64 = por %p62, %p63
      %p65 = scmp.ne.s32.totalorder %s54, %s55
      %p66 = scmp.eq.s32.totalorder %s20, 0
      %p67 = por %p65, %p66
      %p68 = scmp.ne.s32.totalorder %s54, %s55
      %p69 = scmp.eq.s32.totalorder %s21, 3
      %p70 = por %p68, %p69
      %p72 = scmp.ne.s32.totalorder %s55, %s71
      %p73 = scmp.eq.s32.totalorder %s21, 0
      %p74 = por %p72, %p73
      %s76 = sadd.s32 %s75, 1
      %p79 = scmp.eq.s32.totalorder %s15, 3
      %p80 = scmp.ne.s32.totalorder %s75, %s77
      %p81 = scmp.eq.s32.totalorder %s15, 0
      %p82 = por %p80, %p81
      %p83 = scmp.ne.s32.totalorder %s75, %s77
      %p84 = scmp.eq.s32.totalorder %s20, 3
      %p85 = por %p83, %p84
      %p86 = scmp.ne.s32.totalorder %s77, %s78
      %p87 = scmp.eq.s32.totalorder %s20, 0
      %p88 = por %p86, %p87
      %p89 = scmp.ne.s32.totalorder %s77, %s78
      %p90 = scmp.eq.s32.totalorder %s21, 3
      %p91 = por %p89, %p90
      %p93 = scmp.ne.s32.totalorder %s78, %s92
      %p94 = scmp.eq.s32.totalorder %s21, 0
      %p95 = por %p93, %p94
      %s97 = sadd.s32 %s96, 1
      %p100 = scmp.eq.s32.totalorder %s15, 3
      %p101 = scmp.ne.s32.totalorder %s96, %s98
      %p102 = scmp.eq.s32.totalorder %s15, 0
      %p103 = por %p101, %p102
      %p104 = scmp.ne.s32.totalorder %s96, %s98
      %p105 = scmp.eq.s32.totalorder %s20, 3
      %p106 = por %p104, %p105
      %p107 = scmp.ne.s32.totalorder %s98, %s99
      %p108 = scmp.eq.s32.totalorder %s20, 0
      %p109 = por %p107, %p108
      %p110 = scmp.ne.s32.totalorder %s98, %s99
      %p111 = scmp.eq.s32.totalorder %s21, 3
      %p112 = por %p110, %p111
      %p114 = scmp.ne.s32.totalorder %s99, %s113
      %p115 = scmp.eq.s32.totalorder %s21, 0
      %p116 = por %p114, %p115
      %s118 = sadd.s32 %s117, 1
      %p121 = scmp.eq.s32.totalorder %s15, 3
      %p122 = scmp.ne.s32.totalorder %s117, %s119
      %p123 = scmp.eq.s32.totalorder %s15, 0
      %p124 = por %p122, %p123
      %p125 = scmp.ne.s32.totalorder %s117, %s119
      %p126 = scmp.eq.s32.totalorder %s20, 3
      %p127 = por %p125, %p126
      %p128 = scmp.ne.s32.totalorder %s119, %s120
      %p129 = scmp.eq.s32.totalorder %s20, 0
      %p130 = por %p128, %p129
      %p131 = scmp.ne.s32.totalorder %s119, %s120
      %p132 = scmp.eq.s32.totalorder %s21, 3
      %p133 = por %p131, %p132
      %p135 = scmp.ne.s32.totalorder %s120, %s134
      %p136 = scmp.eq.s32.totalorder %s21, 0
      %p137 = por %p135, %p136
      %s139 = sadd.s32 %s138, 1
      %p142 = scmp.eq.s32.totalorder %s15, 3
      %p143 = scmp.ne.s32.totalorder %s138, %s140
      %p144 = scmp.eq.s32.totalorder %s15, 0
      %p145 = por %p143, %p144
      %p146 = scmp.ne.s32.totalorder %s138, %s140
      %p147 = scmp.eq.s32.totalorder %s20, 3
      %p148 = por %p146, %p147
      %p149 = scmp.ne.s32.totalorder %s140, %s141
      %p150 = scmp.eq.s32.totalorder %s20, 0
      %p151 = por %p149, %p150
      %p152 = scmp.ne.s32.totalorder %s140, %s141
      %p153 = scmp.eq.s32.totalorder %s21, 3
      %p154 = por %p152, %p153
      %p156 = scmp.ne.s32.totalorder %s141, %s155
      %p157 = scmp.eq.s32.totalorder %s21, 0
      %p158 = por %p156, %p157
      %s159 = ssub.s32 %s15, %s22
      %p160 = scmp.eq.s32.totalorder %s159, 0
      %s162 = sadd.s32 %s161, 1
      %s163 = scalar_select %p160, %s161, %s162
      %p166 = pneg %p160
      %p167 = scmp.eq.s32.totalorder %s15, 3
      %p168 = por %p166, %p167
      %p169 = scmp.ne.s32.totalorder %s161, %s164
      %p170 = scmp.eq.s32.totalorder %s15, 0
      %p171 = por %p169, %p170
      %p172 = scmp.ne.s32.totalorder %s161, %s164
      %p173 = scmp.eq.s32.totalorder %s20, 3
      %p174 = por %p172, %p173
      %p175 = scmp.ne.s32.totalorder %s164, %s165
      %p176 = scmp.eq.s32.totalorder %s20, 0
      %p177 = por %p175, %p176
      %p178 = scmp.ne.s32.totalorder %s164, %s165
      %p179 = scmp.eq.s32.totalorder %s21, 3
      %p180 = por %p178, %p179
      %p182 = scmp.ne.s32.totalorder %s165, %s181
      %p183 = scmp.eq.s32.totalorder %s21, 0
      %p184 = por %p182, %p183
      %p185 = scmp.le.s32.totalorder 1, %s15
      %p186 = scmp.lt.s32.totalorder %s15, 5
      %p187 = pnand %p185, %p186
      %p188 = pneg %p187
      // Predicated region
      $region9: #{tpu_custom_call.1} parent=5 // pred_check
        _
      $region10: #{tpu_custom_call.1} parent=5 // pred_check_branch
        %190 = sbr.rel (%p187) target = $region12
      $region11: #{tpu_custom_call.1} parent=5 // pred_region
        %s191 = ssub.s32 %s15, 1
        // Predicated region
        $region13: #{tpu_custom_call.1} parent=11 // pred_check
          %p192 = pneg %p88
        $region14: #{tpu_custom_call.1} parent=11 // pred_check_branch
          %194 = sbr.rel (%p192) target = $region16
        $region15: #{tpu_custom_call.1} parent=11 // pred_region
          _
        $region16: #{tpu_custom_call.1} parent=11 // pred_fallthru
          _
        // Predicated region
        $region17: #{tpu_custom_call.1} parent=11 // pred_check
          %p195 = pneg %p109
        $region18: #{tpu_custom_call.1} parent=11 // pred_check_branch
          %197 = sbr.rel (%p195) target = $region20
        $region19: #{tpu_custom_call.1} parent=11 // pred_region
          _
        $region20: #{tpu_custom_call.1} parent=11 // pred_fallthru
          _
        // Predicated region
        $region21: #{tpu_custom_call.1} parent=11 // pred_check
          %p198 = pneg %p130
        $region22: #{tpu_custom_call.1} parent=11 // pred_check_branch
          %200 = sbr.rel (%p198) target = $region24
        $region23: #{tpu_custom_call.1} parent=11 // pred_region
          _
        $region24: #{tpu_custom_call.1} parent=11 // pred_fallthru
          _
        // Predicated region
        $region25: #{tpu_custom_call.1} parent=11 // pred_check
          %p201 = pneg %p151
        $region26: #{tpu_custom_call.1} parent=11 // pred_check_branch
          %203 = sbr.rel (%p201) target = $region28
        $region27: #{tpu_custom_call.1} parent=11 // pred_region
          _
        $region28: #{tpu_custom_call.1} parent=11 // pred_fallthru
          _
      $region12: #{tpu_custom_call.1} parent=5 // pred_fallthru
        _
      %p204 = scmp.lt.s32.totalorder %s15, 4
      // Predicated region
      $region29: #{tpu_custom_call.1} parent=5 // pred_check
        %p205 = pneg %p204
      $region30: #{tpu_custom_call.1} parent=5 // pred_check_branch
        %207 = sbr.rel (%p205) target = $region32
      $region31: #{tpu_custom_call.1} parent=5 // pred_region
        // Predicated region
        $region33: #{tpu_custom_call.1} parent=31 // pred_check
          %p208 = pneg %p35
        $region34: #{tpu_custom_call.1} parent=31 // pred_check_branch
          %210 = sbr.rel (%p208) target = $region36
        $region35: #{tpu_custom_call.1} parent=31 // pred_region
          %s211 = smul.u32 8, %s15
          %p212 = scmp.lt.s32.totalorder %s211, 31
          %s213 = scalar_select %p212, %s211, 31
          %s214 = smul.addr %s213, 3
          %s215 = smul.addr %s214, 4
          %s216 = scalar_lea.vmem %s0, %s215
          %s217 = smul.u32 8, %s15
        $region36: #{tpu_custom_call.1} parent=31 // pred_fallthru
          _
        // Predicated region
        $region37: #{tpu_custom_call.1} parent=31 // pred_check
          %p218 = pneg %p61
        $region38: #{tpu_custom_call.1} parent=31 // pred_check_branch
          %220 = sbr.rel (%p218) target = $region40
        $region39: #{tpu_custom_call.1} parent=31 // pred_region
          %s221 = smul.u32 8, %s15
          %p222 = scmp.lt.s32.totalorder %s221, 31
          %s223 = scalar_select %p222, %s221, 31
          %s224 = smul.addr %s223, 3
          %s225 = smul.addr %s224, 4
          %s226 = scalar_lea.vmem %s1, %s225
          %s227 = smul.u32 8, %s15
        $region40: #{tpu_custom_call.1} parent=31 // pred_fallthru
          _
      $region32: #{tpu_custom_call.1} parent=5 // pred_fallthru
        _
      %p228 = scmp.le.s32.totalorder 1, %s15
      %p229 = scmp.lt.s32.totalorder %s15, 5
      %p230 = pnand %p228, %p229
      %p231 = pneg %p230
      // Predicated region
      $region41: #{tpu_custom_call.1} parent=5 // pred_check
        _
      $region42: #{tpu_custom_call.1} parent=5 // pred_check_branch
        %233 = sbr.rel (%p230) target = $region44
      $region43: #{tpu_custom_call.1} parent=5 // pred_region
        %s234 = ssub.s32 %s15, 1
        %s235 = smul.u32 8, %s20
        %p236 = scmp.lt.s32.totalorder %s235, 31
        %s237 = scalar_select %p236, %s235, 31
        %s238 = smul.addr %s237, 3
        %s239 = smul.addr %s238, 4
        %s240 = scalar_lea.vmem %s0, %s239
        %p241 = pneg %p41
        %p242 = pneg %p38
        %s243 = smul.u32 8, %s20
        %p244 = scmp.lt.s32.totalorder %s243, 31
        %s245 = scalar_select %p244, %s243, 31
        %s246 = smul.addr %s245, 3
        %s247 = smul.addr %s246, 4
        %s248 = scalar_lea.vmem %s1, %s247
        %p249 = pneg %p67
        %p250 = pneg %p64
        %p251 = pneg %p88
        %p252 = pneg %p85
        %p253 = pneg %p109
        %p254 = pneg %p106
        %p255 = pneg %p130
        %p256 = pneg %p127
        %p257 = pneg %p151
        %p258 = pneg %p148
        %p259 = pneg %p177
        %p260 = pneg %p174
        %s261 = sand.u32 %s164, 1
        %s262 = scalar_lea.sflag [#allocation3], %s261
        %s263 = sand.u32 %s164, 1
        %s264 = smul.addr %s263, 8
        %s265 = scalar_lea.vmem [#allocation2], %s264
        %s266 = smul.u32 8, %s20
        %p267 = scmp.lt.s32.totalorder %s266, 31
        %s268 = scalar_select %p267, %s266, 31
        %s269 = smul.addr %s268, 3
        %s270 = smul.addr %s269, 4
        %s271 = scalar_lea.vmem %s0, %s270
        %s272 = smul.u32 8, %s20
        %s273 = smul.u32 8, %s20
        %p274 = scmp.lt.s32.totalorder %s273, 31
        %s275 = scalar_select %p274, %s273, 31
        %s276 = smul.addr %s275, 3
        %s277 = smul.addr %s276, 4
        %s278 = scalar_lea.vmem %s1, %s277
        %s279 = smul.u32 8, %s20
        %v281 = vld [vmem:[%s271] sm:$0xf]
        %v282 = vld [vmem:[%s271 + $0x4] sm:$0xf]
        %v283 = vld [vmem:[%s271 + $0xc] sm:$0xf]
        %v284 = vld [vmem:[%s271 + $0x10] sm:$0xf]
        %v285 = vld [vmem:[%s271 + $0x18] sm:$0xf]
        %v286 = vld [vmem:[%s271 + $0x1c] sm:$0xf]
        %v287 = vld [vmem:[%s271 + $0x24] sm:$0xf]
        %v288 = vld [vmem:[%s271 + $0x28] sm:$0xf]
        %v289 = vld [vmem:[%s271 + $0x30] sm:$0xf]
        %v290 = vld [vmem:[%s271 + $0x34] sm:$0xf]
        %v291 = vld [vmem:[%s271 + $0x3c] sm:$0xf]
        %v292 = vld [vmem:[%s271 + $0x40] sm:$0xf]
        %v293 = vld [vmem:[%s271 + $0x48] sm:$0xf]
        %v294 = vld [vmem:[%s271 + $0x4c] sm:$0xf]
        %v295 = vld [vmem:[%s271 + $0x54] sm:$0xf]
        %v296 = vld [vmem:[%s271 + $0x58] sm:$0xf]
        %v297 = vld [vmem:[%s271 + $0x8] sm:$0x1]
        %v298 = vld [vmem:[%s271 + $0x14] sm:$0x1]
        %v299 = vld [vmem:[%s271 + $0x20] sm:$0x1]
        %v300 = vld [vmem:[%s271 + $0x2c] sm:$0x1]
        %v301 = vld [vmem:[%s271 + $0x38] sm:$0x1]
        %v302 = vld [vmem:[%s271 + $0x44] sm:$0x1]
        %v303 = vld [vmem:[%s271 + $0x50] sm:$0x1]
        %v304 = vld [vmem:[%s271 + $0x5c] sm:$0x1]
        %vm305 = vsmask.f32 3328
        %vm306 = vsmask.f32 7440
        %vm307 = vmor %vm305, %vm306
        %v309 = vshrl.u32 %v281, 16
        %v311 = vrot.slane %v309, 4
        %v312 = vshll.u32 %v281, 16
        %v314 = vrot.slane %v312, 5
        %v315 = vor.u32 %v311, %v314
        %v316 = vrot.slane %v315, 4
        %v318 = vshll.u32 %v282, 16
        %v320 = vrot.slane %v318, 5
        %v321 = vsel %vm307, %v316, %v320
        %v322 = vshrl.u32 %v282, 16
        %v324 = vrot.slane %v322, 4
        %v325 = vor.u32 %v324, %v320
        %v326 = vrot.slane %v325, 4
        %v328 = vshll.u32 %v297, 16
        %v330 = vrot.slane %v328, 5
        %v331 = vsel %vm307, %v326, %v330
        %v333 = vshrl.u32 %v283, 16
        %v335 = vrot.slane %v333, 4
        %v336 = vshll.u32 %v283, 16
        %v338 = vrot.slane %v336, 5
        %v339 = vor.u32 %v335, %v338
        %v340 = vrot.slane %v339, 4
        %v342 = vshll.u32 %v284, 16
        %v344 = vrot.slane %v342, 5
        %v345 = vsel %vm307, %v340, %v344
        %v346 = vshrl.u32 %v284, 16
        %v348 = vrot.slane %v346, 4
        %v349 = vor.u32 %v348, %v344
        %v350 = vrot.slane %v349, 4
        %v352 = vshll.u32 %v298, 16
        %v354 = vrot.slane %v352, 5
        %v355 = vsel %vm307, %v350, %v354
        %v357 = vshrl.u32 %v285, 16
        %v359 = vrot.slane %v357, 4
        %v360 = vshll.u32 %v285, 16
        %v362 = vrot.slane %v360, 5
        %v363 = vor.u32 %v359, %v362
        %v364 = vrot.slane %v363, 4
        %v366 = vshll.u32 %v286, 16
        %v368 = vrot.slane %v366, 5
        %v369 = vsel %vm307, %v364, %v368
        %v370 = vshrl.u32 %v286, 16
        %v372 = vrot.slane %v370, 4
        %v373 = vor.u32 %v372, %v368
        %v374 = vrot.slane %v373, 4
        %v376 = vshll.u32 %v299, 16
        %v378 = vrot.slane %v376, 5
        %v379 = vsel %vm307, %v374, %v378
        %v381 = vshrl.u32 %v287, 16
        %v383 = vrot.slane %v381, 4
        %v384 = vshll.u32 %v287, 16
        %v386 = vrot.slane %v384, 5
        %v387 = vor.u32 %v383, %v386
        %v388 = vrot.slane %v387, 4
        %v390 = vshll.u32 %v288, 16
        %v392 = vrot.slane %v390, 5
        %v393 = vsel %vm307, %v388, %v392
        %v394 = vshrl.u32 %v288, 16
        %v396 = vrot.slane %v394, 4
        %v397 = vor.u32 %v396, %v392
        %v398 = vrot.slane %v397, 4
        %v400 = vshll.u32 %v300, 16
        %v402 = vrot.slane %v400, 5
        %v403 = vsel %vm307, %v398, %v402
        %v405 = vshrl.u32 %v289, 16
        %v407 = vrot.slane %v405, 4
        %v408 = vshll.u32 %v289, 16
        %v410 = vrot.slane %v408, 5
        %v411 = vor.u32 %v407, %v410
        %v412 = vrot.slane %v411, 4
        %v414 = vshll.u32 %v290, 16
        %v416 = vrot.slane %v414, 5
        %v417 = vsel %vm307, %v412, %v416
        %v418 = vshrl.u32 %v290, 16
        %v420 = vrot.slane %v418, 4
        %v421 = vor.u32 %v420, %v416
        %v422 = vrot.slane %v421, 4
        %v424 = vshll.u32 %v301, 16
        %v426 = vrot.slane %v424, 5
        %v427 = vsel %vm307, %v422, %v426
        %v429 = vshrl.u32 %v291, 16
        %v431 = vrot.slane %v429, 4
        %v432 = vshll.u32 %v291, 16
        %v434 = vrot.slane %v432, 5
        %v435 = vor.u32 %v431, %v434
        %v436 = vrot.slane %v435, 4
        %v438 = vshll.u32 %v292, 16
        %v440 = vrot.slane %v438, 5
        %v441 = vsel %vm307, %v436, %v440
        %v442 = vshrl.u32 %v292, 16
        %v444 = vrot.slane %v442, 4
        %v445 = vor.u32 %v444, %v440
        %v446 = vrot.slane %v445, 4
        %v448 = vshll.u32 %v302, 16
        %v450 = vrot.slane %v448, 5
        %v451 = vsel %vm307, %v446, %v450
        %v453 = vshrl.u32 %v293, 16
        %v455 = vrot.slane %v453, 4
        %v456 = vshll.u32 %v293, 16
        %v458 = vrot.slane %v456, 5
        %v459 = vor.u32 %v455, %v458
        %v460 = vrot.slane %v459, 4
        %v462 = vshll.u32 %v294, 16
        %v464 = vrot.slane %v462, 5
        %v465 = vsel %vm307, %v460, %v464
        %v466 = vshrl.u32 %v294, 16
        %v468 = vrot.slane %v466, 4
        %v469 = vor.u32 %v468, %v464
        %v470 = vrot.slane %v469, 4
        %v472 = vshll.u32 %v303, 16
        %v474 = vrot.slane %v472, 5
        %v475 = vsel %vm307, %v470, %v474
        %v477 = vshrl.u32 %v295, 16
        %v479 = vrot.slane %v477, 4
        %v480 = vshll.u32 %v295, 16
        %v482 = vrot.slane %v480, 5
        %v483 = vor.u32 %v479, %v482
        %v484 = vrot.slane %v483, 4
        %v486 = vshll.u32 %v296, 16
        %v488 = vrot.slane %v486, 5
        %v489 = vsel %vm307, %v484, %v488
        %v490 = vshrl.u32 %v296, 16
        %v492 = vrot.slane %v490, 4
        %v493 = vor.u32 %v492, %v488
        %v494 = vrot.slane %v493, 4
        %v496 = vshll.u32 %v304, 16
        %v498 = vrot.slane %v496, 5
        %v499 = vsel %vm307, %v494, %v498
        %v500 = vld [vmem:[%s278] sm:$0xf]
        %v501 = vld [vmem:[%s278 + $0x4] sm:$0xf]
        %v502 = vld [vmem:[%s278 + $0xc] sm:$0xf]
        %v503 = vld [vmem:[%s278 + $0x10] sm:$0xf]
        %v504 = vld [vmem:[%s278 + $0x18] sm:$0xf]
        %v505 = vld [vmem:[%s278 + $0x1c] sm:$0xf]
        %v506 = vld [vmem:[%s278 + $0x24] sm:$0xf]
        %v507 = vld [vmem:[%s278 + $0x28] sm:$0xf]
        %v508 = vld [vmem:[%s278 + $0x30] sm:$0xf]
        %v509 = vld [vmem:[%s278 + $0x34] sm:$0xf]
        %v510 = vld [vmem:[%s278 + $0x3c] sm:$0xf]
        %v511 = vld [vmem:[%s278 + $0x40] sm:$0xf]
        %v512 = vld [vmem:[%s278 + $0x48] sm:$0xf]
        %v513 = vld [vmem:[%s278 + $0x4c] sm:$0xf]
        %v514 = vld [vmem:[%s278 + $0x54] sm:$0xf]
        %v515 = vld [vmem:[%s278 + $0x58] sm:$0xf]
        %v516 = vld [vmem:[%s278 + $0x8] sm:$0x1]
        %v517 = vld [vmem:[%s278 + $0x14] sm:$0x1]
        %v518 = vld [vmem:[%s278 + $0x20] sm:$0x1]
        %v519 = vld [vmem:[%s278 + $0x2c] sm:$0x1]
        %v520 = vld [vmem:[%s278 + $0x38] sm:$0x1]
        %v521 = vld [vmem:[%s278 + $0x44] sm:$0x1]
        %v522 = vld [vmem:[%s278 + $0x50] sm:$0x1]
        %v523 = vld [vmem:[%s278 + $0x5c] sm:$0x1]
        %v525 = vshrl.u32 %v500, 16
        %v527 = vrot.slane %v525, 4
        %v528 = vshll.u32 %v500, 16
        %v530 = vrot.slane %v528, 5
        %v531 = vor.u32 %v527, %v530
        %v532 = vrot.slane %v531, 4
        %v534 = vshll.u32 %v501, 16
        %v536 = vrot.slane %v534, 5
        %v537 = vsel %vm307, %v532, %v536
        %v538 = vshrl.u32 %v501, 16
        %v540 = vrot.slane %v538, 4
        %v541 = vor.u32 %v540, %v536
        %v542 = vrot.slane %v541, 4
        %v544 = vshll.u32 %v516, 16
        %v546 = vrot.slane %v544, 5
        %v547 = vsel %vm307, %v542, %v546
        %v549 = vshrl.u32 %v502, 16
        %v551 = vrot.slane %v549, 4
        %v552 = vshll.u32 %v502, 16
        %v554 = vrot.slane %v552, 5
        %v555 = vor.u32 %v551, %v554
        %v556 = vrot.slane %v555, 4
        %v558 = vshll.u32 %v503, 16
        %v560 = vrot.slane %v558, 5
        %v561 = vsel %vm307, %v556, %v560
        %v562 = vshrl.u32 %v503, 16
        %v564 = vrot.slane %v562, 4
        %v565 = vor.u32 %v564, %v560
        %v566 = vrot.slane %v565, 4
        %v568 = vshll.u32 %v517, 16
        %v570 = vrot.slane %v568, 5
        %v571 = vsel %vm307, %v566, %v570
        %v573 = vshrl.u32 %v504, 16
        %v575 = vrot.slane %v573, 4
        %v576 = vshll.u32 %v504, 16
        %v578 = vrot.slane %v576, 5
        %v579 = vor.u32 %v575, %v578
        %v580 = vrot.slane %v579, 4
        %v582 = vshll.u32 %v505, 16
        %v584 = vrot.slane %v582, 5
        %v585 = vsel %vm307, %v580, %v584
        %v586 = vshrl.u32 %v505, 16
        %v588 = vrot.slane %v586, 4
        %v589 = vor.u32 %v588, %v584
        %v590 = vrot.slane %v589, 4
        %v592 = vshll.u32 %v518, 16
        %v594 = vrot.slane %v592, 5
        %v595 = vsel %vm307, %v590, %v594
        %v597 = vshrl.u32 %v506, 16
        %v599 = vrot.slane %v597, 4
        %v600 = vshll.u32 %v506, 16
        %v602 = vrot.slane %v600, 5
        %v603 = vor.u32 %v599, %v602
        %v604 = vrot.slane %v603, 4
        %v606 = vshll.u32 %v507, 16
        %v608 = vrot.slane %v606, 5
        %v609 = vsel %vm307, %v604, %v608
        %v610 = vshrl.u32 %v507, 16
        %v612 = vrot.slane %v610, 4
        %v613 = vor.u32 %v612, %v608
        %v614 = vrot.slane %v613, 4
        %v616 = vshll.u32 %v519, 16
        %v618 = vrot.slane %v616, 5
        %v619 = vsel %vm307, %v614, %v618
        %v621 = vshrl.u32 %v508, 16
        %v623 = vrot.slane %v621, 4
        %v624 = vshll.u32 %v508, 16
        %v626 = vrot.slane %v624, 5
        %v627 = vor.u32 %v623, %v626
        %v628 = vrot.slane %v627, 4
        %v630 = vshll.u32 %v509, 16
        %v632 = vrot.slane %v630, 5
        %v633 = vsel %vm307, %v628, %v632
        %v634 = vshrl.u32 %v509, 16
        %v636 = vrot.slane %v634, 4
        %v637 = vor.u32 %v636, %v632
        %v638 = vrot.slane %v637, 4
        %v640 = vshll.u32 %v520, 16
        %v642 = vrot.slane %v640, 5
        %v643 = vsel %vm307, %v638, %v642
        %v645 = vshrl.u32 %v510, 16
        %v647 = vrot.slane %v645, 4
        %v648 = vshll.u32 %v510, 16
        %v650 = vrot.slane %v648, 5
        %v651 = vor.u32 %v647, %v650
        %v652 = vrot.slane %v651, 4
        %v654 = vshll.u32 %v511, 16
        %v656 = vrot.slane %v654, 5
        %v657 = vsel %vm307, %v652, %v656
        %v658 = vshrl.u32 %v511, 16
        %v660 = vrot.slane %v658, 4
        %v661 = vor.u32 %v660, %v656
        %v662 = vrot.slane %v661, 4
        %v664 = vshll.u32 %v521, 16
        %v666 = vrot.slane %v664, 5
        %v667 = vsel %vm307, %v662, %v666
        %v669 = vshrl.u32 %v512, 16
        %v671 = vrot.slane %v669, 4
        %v672 = vshll.u32 %v512, 16
        %v674 = vrot.slane %v672, 5
        %v675 = vor.u32 %v671, %v674
        %v676 = vrot.slane %v675, 4
        %v678 = vshll.u32 %v513, 16
        %v680 = vrot.slane %v678, 5
        %v681 = vsel %vm307, %v676, %v680
        %v682 = vshrl.u32 %v513, 16
        %v684 = vrot.slane %v682, 4
        %v685 = vor.u32 %v684, %v680
        %v686 = vrot.slane %v685, 4
        %v688 = vshll.u32 %v522, 16
        %v690 = vrot.slane %v688, 5
        %v691 = vsel %vm307, %v686, %v690
        %v693 = vshrl.u32 %v514, 16
        %v695 = vrot.slane %v693, 4
        %v696 = vshll.u32 %v514, 16
        %v698 = vrot.slane %v696, 5
        %v699 = vor.u32 %v695, %v698
        %v700 = vrot.slane %v699, 4
        %v702 = vshll.u32 %v515, 16
        %v704 = vrot.slane %v702, 5
        %v705 = vsel %vm307, %v700, %v704
        %v706 = vshrl.u32 %v515, 16
        %v708 = vrot.slane %v706, 4
        %v709 = vor.u32 %v708, %v704
        %v710 = vrot.slane %v709, 4
        %v712 = vshll.u32 %v523, 16
        %v714 = vrot.slane %v712, 5
        %v715 = vsel %vm307, %v710, %v714
        %v716 = vld [vmem:[%s2] sm:$0x3]
        %v717 = vld [vmem:[%s3] sm:$0x3]
        %v718 = vunpack.c.l.b16 %v321
        %v719 = vunpack.c.l.b16 %v331
        %v720 = vunpack.c.l.b16 %v345
        %v721 = vunpack.c.l.b16 %v355
        %v722 = vunpack.c.l.b16 %v369
        %v723 = vunpack.c.l.b16 %v379
        %v724 = vunpack.c.l.b16 %v393
        %v725 = vunpack.c.l.b16 %v403
        %v726 = vunpack.c.l.b16 %v417
        %v727 = vunpack.c.l.b16 %v427
        %v728 = vunpack.c.l.b16 %v441
        %v729 = vunpack.c.l.b16 %v451
        %v730 = vunpack.c.l.b16 %v465
        %v731 = vunpack.c.l.b16 %v475
        %v732 = vunpack.c.l.b16 %v489
        %v733 = vunpack.c.l.b16 %v499
        %v734 = vpack.c.b16 %v719, %v718
        %v735 = vpack.c.b16 %v721, %v720
        %v736 = vpack.c.b16 %v723, %v722
        %v737 = vpack.c.b16 %v725, %v724
        %v738 = vpack.c.b16 %v727, %v726
        %v739 = vpack.c.b16 %v729, %v728
        %v740 = vpack.c.b16 %v731, %v730
        %v741 = vpack.c.b16 %v733, %v732
        %vm742 = vcmask 31744
        %v744 = vsel %vm742, %v734, 0
        %v747 = vsel %vm742, %v735, 0
        %v750 = vsel %vm742, %v736, 0
        %v753 = vsel %vm742, %v737, 0
        %v756 = vsel %vm742, %v738, 0
        %v759 = vsel %vm742, %v739, 0
        %v762 = vsel %vm742, %v740, 0
        %v765 = vsel %vm742, %v741, 0
        %vm767 = vcmask 1041408
        %v769 = vsel %vm767, %v717, 0
        %771 = vmatprep.subr.bf16.mxu0 0
        %772 = vmatpush1.bf16.msra.mxu0 0
        %773 = vmatprep.subr.bf16.mxu0 0
        %774 = vmatpush1.bf16.msra.mxu0 0
        %775 = vmatprep.subr.bf16.mxu0 0
        %776 = vmatpush1.bf16.msra.mxu0 0
        %777 = vmatprep.subr.bf16.mxu0 0
        %778 = vmatpush1.bf16.msra.mxu0 0
        %779 = vmatprep.subr.bf16.mxu0 0
        %780 = vmatpush1.bf16.msra.mxu0 0
        %781 = vmatprep.subr.bf16.mxu0 0
        %782 = vmatpush1.bf16.msra.mxu0 0
        %783 = vmatprep.subr.bf16.mxu0 0
        %784 = vmatpush1.bf16.msra.mxu0 0
        %785 = vmatprep.subr.bf16.mxu0 0
        %786 = vmatpush1.bf16.msra.mxu0 %v769
        %787 = vmatprep.subr.bf16.mxu0 0
        %788 = vmatpush2.bf16.msra.mxu0 0
        %789 = vmatprep.subr.bf16.mxu0 0
        %790 = vmatpush2.bf16.msra.mxu0 0
        %791 = vmatprep.subr.bf16.mxu0 0
        %792 = vmatpush2.bf16.msra.mxu0 0
        %793 = vmatprep.subr.bf16.mxu0 0
        %794 = vmatpush2.bf16.msra.mxu0 0
        %795 = vmatprep.subr.bf16.mxu0 0
        %796 = vmatpush2.bf16.msra.mxu0 0
        %797 = vmatprep.subr.bf16.mxu0 0
        %798 = vmatpush2.bf16.msra.mxu0 0
        %799 = vmatprep.subr.bf16.mxu0 0
        %800 = vmatpush2.bf16.msra.mxu0 0
        %801 = vmatprep.subr.bf16.mxu0 0
        %802 = vmatpush2.bf16.msra.mxu0 0
        %803 = vmatprep.mubr.bf16.mxu0 0
        %804 = vmatmul.mubr.bf16.gmra.mxu0 %v744
        %v805 = vpop.f32.mrf.mxu0
        %v806 = vadd.f32 0.0, %v805
        %v807 = vpop.f32.mrf.mxu0
        %v808 = vpop.f32.mrf.mxu0
        %v809 = vadd.f32 0.0, %v808
        %v810 = vpop.f32.mrf.mxu0
        %811 = vmatprep.mubr.bf16.mxu0 0
        %812 = vmatmul.mubr.bf16.gmra.mxu0 %v747
        %v813 = vpop.f32.mrf.mxu0
        %v814 = vadd.f32 0.0, %v813
        %v815 = vpop.f32.mrf.mxu0
        %v816 = vpop.f32.mrf.mxu0
        %v817 = vadd.f32 0.0, %v816
        %v818 = vpop.f32.mrf.mxu0
        %819 = vmatprep.mubr.bf16.mxu0 0
        %820 = vmatmul.mubr.bf16.gmra.mxu0 %v750
        %v821 = vpop.f32.mrf.mxu0
        %v822 = vadd.f32 0.0, %v821
        %v823 = vpop.f32.mrf.mxu0
        %v824 = vpop.f32.mrf.mxu0
        %v825 = vadd.f32 0.0, %v824
        %v826 = vpop.f32.mrf.mxu0
        %827 = vmatprep.mubr.bf16.mxu0 0
        %828 = vmatmul.mubr.bf16.gmra.mxu0 %v753
        %v829 = vpop.f32.mrf.mxu0
        %v830 = vadd.f32 0.0, %v829
        %v831 = vpop.f32.mrf.mxu0
        %v832 = vpop.f32.mrf.mxu0
        %v833 = vadd.f32 0.0, %v832
        %v834 = vpop.f32.mrf.mxu0
        %835 = vmatprep.mubr.bf16.mxu0 0
        %836 = vmatmul.mubr.bf16.gmra.mxu0 %v756
        %v837 = vpop.f32.mrf.mxu0
        %v838 = vadd.f32 0.0, %v837
        %v839 = vpop.f32.mrf.mxu0
        %v840 = vpop.f32.mrf.mxu0
        %v841 = vadd.f32 0.0, %v840
        %v842 = vpop.f32.mrf.mxu0
        %843 = vmatprep.mubr.bf16.mxu0 0
        %844 = vmatmul.mubr.bf16.gmra.mxu0 %v759
        %v845 = vpop.f32.mrf.mxu0
        %v846 = vadd.f32 0.0, %v845
        %v847 = vpop.f32.mrf.mxu0
        %v848 = vpop.f32.mrf.mxu0
        %v849 = vadd.f32 0.0, %v848
        %v850 = vpop.f32.mrf.mxu0
        %851 = vmatprep.mubr.bf16.mxu0 0
        %852 = vmatmul.mubr.bf16.gmra.mxu0 %v762
        %v853 = vpop.f32.mrf.mxu0
        %v854 = vadd.f32 0.0, %v853
        %v855 = vpop.f32.mrf.mxu0
        %v856 = vpop.f32.mrf.mxu0
        %v857 = vadd.f32 0.0, %v856
        %v858 = vpop.f32.mrf.mxu0
        %859 = vmatprep.mubr.bf16.mxu0 0
        %860 = vmatmul.mubr.bf16.gmra.mxu0 %v765
        %v861 = vpop.f32.mrf.mxu0
        %v862 = vadd.f32 0.0, %v861
        %v863 = vpop.f32.mrf.mxu0
        %v864 = vpop.f32.mrf.mxu0
        %v865 = vadd.f32 0.0, %v864
        %v866 = vpop.f32.mrf.mxu0
        %867 = vdwg.mxu0
        %v884 = vunpack.c.l.b16 %v281
        %v885 = vunpack.c.l.b16 %v282
        %v886 = vunpack.c.l.b16 %v283
        %v887 = vunpack.c.l.b16 %v284
        %v888 = vunpack.c.l.b16 %v285
        %v889 = vunpack.c.l.b16 %v286
        %v890 = vunpack.c.l.b16 %v287
        %v891 = vunpack.c.l.b16 %v288
        %v892 = vunpack.c.l.b16 %v289
        %v893 = vunpack.c.l.b16 %v290
        %v894 = vunpack.c.l.b16 %v291
        %v895 = vunpack.c.l.b16 %v292
        %v896 = vunpack.c.l.b16 %v293
        %v897 = vunpack.c.l.b16 %v294
        %v898 = vunpack.c.l.b16 %v295
        %v899 = vunpack.c.l.b16 %v296
        %v900 = vpack.c.b16 %v885, %v884
        %v901 = vpack.c.b16 %v887, %v886
        %v902 = vpack.c.b16 %v889, %v888
        %v903 = vpack.c.b16 %v891, %v890
        %v904 = vpack.c.b16 %v893, %v892
        %v905 = vpack.c.b16 %v895, %v894
        %v906 = vpack.c.b16 %v897, %v896
        %v907 = vpack.c.b16 %v899, %v898
        %v909 = vsel %vm742, %v900, 0
        %v912 = vsel %vm742, %v901, 0
        %v915 = vsel %vm742, %v902, 0
        %v918 = vsel %vm742, %v903, 0
        %v921 = vsel %vm742, %v904, 0
        %v924 = vsel %vm742, %v905, 0
        %v927 = vsel %vm742, %v906, 0
        %v930 = vsel %vm742, %v907, 0
        %v933 = vsel %vm767, %v716, 0
        %935 = vmatprep.subr.bf16.mxu0 0
        %936 = vmatpush1.bf16.msra.mxu0 0
        %937 = vmatprep.subr.bf16.mxu0 0
        %938 = vmatpush1.bf16.msra.mxu0 0
        %939 = vmatprep.subr.bf16.mxu0 0
        %940 = vmatpush1.bf16.msra.mxu0 0
        %941 = vmatprep.subr.bf16.mxu0 0
        %942 = vmatpush1.bf16.msra.mxu0 0
        %943 = vmatprep.subr.bf16.mxu0 0
        %944 = vmatpush1.bf16.msra.mxu0 0
        %945 = vmatprep.subr.bf16.mxu0 0
        %946 = vmatpush1.bf16.msra.mxu0 0
        %947 = vmatprep.subr.bf16.mxu0 0
        %948 = vmatpush1.bf16.msra.mxu0 0
        %949 = vmatprep.subr.bf16.mxu0 0
        %950 = vmatpush1.bf16.msra.mxu0 %v933
        %951 = vmatprep.subr.bf16.mxu0 0
        %952 = vmatpush2.bf16.msra.mxu0 0
        %953 = vmatprep.subr.bf16.mxu0 0
        %954 = vmatpush2.bf16.msra.mxu0 0
        %955 = vmatprep.subr.bf16.mxu0 0
        %956 = vmatpush2.bf16.msra.mxu0 0
        %957 = vmatprep.subr.bf16.mxu0 0
        %958 = vmatpush2.bf16.msra.mxu0 0
        %959 = vmatprep.subr.bf16.mxu0 0
        %960 = vmatpush2.bf16.msra.mxu0 0
        %961 = vmatprep.subr.bf16.mxu0 0
        %962 = vmatpush2.bf16.msra.mxu0 0
        %963 = vmatprep.subr.bf16.mxu0 0
        %964 = vmatpush2.bf16.msra.mxu0 0
        %965 = vmatprep.subr.bf16.mxu0 0
        %966 = vmatpush2.bf16.msra.mxu0 0
        %967 = vmatprep.mubr.bf16.mxu0 0
        %968 = vmatmul.mubr.bf16.gmra.mxu0 %v909
        %v969 = vpop.f32.mrf.mxu0
        %v970 = vadd.f32 %v806, %v969
        %v971 = vpop.f32.mrf.mxu0
        %v972 = vpop.f32.mrf.mxu0
        %v973 = vadd.f32 %v809, %v972
        %v974 = vpop.f32.mrf.mxu0
        %975 = vmatprep.mubr.bf16.mxu0 0
        %976 = vmatmul.mubr.bf16.gmra.mxu0 %v912
        %v977 = vpop.f32.mrf.mxu0
        %v978 = vadd.f32 %v814, %v977
        %v979 = vpop.f32.mrf.mxu0
        %v980 = vpop.f32.mrf.mxu0
        %v981 = vadd.f32 %v817, %v980
        %v982 = vpop.f32.mrf.mxu0
        %983 = vmatprep.mubr.bf16.mxu0 0
        %984 = vmatmul.mubr.bf16.gmra.mxu0 %v915
        %v985 = vpop.f32.mrf.mxu0
        %v986 = vadd.f32 %v822, %v985
        %v987 = vpop.f32.mrf.mxu0
        %v988 = vpop.f32.mrf.mxu0
        %v989 = vadd.f32 %v825, %v988
        %v990 = vpop.f32.mrf.mxu0
        %991 = vmatprep.mubr.bf16.mxu0 0
        %992 = vmatmul.mubr.bf16.gmra.mxu0 %v918
        %v993 = vpop.f32.mrf.mxu0
        %v994 = vadd.f32 %v830, %v993
        %v995 = vpop.f32.mrf.mxu0
        %v996 = vpop.f32.mrf.mxu0
        %v997 = vadd.f32 %v833, %v996
        %v998 = vpop.f32.mrf.mxu0
        %999 = vmatprep.mubr.bf16.mxu0 0
        %1000 = vmatmul.mubr.bf16.gmra.mxu0 %v921
        %v1001 = vpop.f32.mrf.mxu0
        %v1002 = vadd.f32 %v838, %v1001
        %v1003 = vpop.f32.mrf.mxu0
        %v1004 = vpop.f32.mrf.mxu0
        %v1005 = vadd.f32 %v841, %v1004
        %v1006 = vpop.f32.mrf.mxu0
        %1007 = vmatprep.mubr.bf16.mxu0 0
        %1008 = vmatmul.mubr.bf16.gmra.mxu0 %v924
        %v1009 = vpop.f32.mrf.mxu0
        %v1010 = vadd.f32 %v846, %v1009
        %v1011 = vpop.f32.mrf.mxu0
        %v1012 = vpop.f32.mrf.mxu0
        %v1013 = vadd.f32 %v849, %v1012
        %v1014 = vpop.f32.mrf.mxu0
        %1015 = vmatprep.mubr.bf16.mxu0 0
        %1016 = vmatmul.mubr.bf16.gmra.mxu0 %v927
        %v1017 = vpop.f32.mrf.mxu0
        %v1018 = vadd.f32 %v854, %v1017
        %v1019 = vpop.f32.mrf.mxu0
        %v1020 = vpop.f32.mrf.mxu0
        %v1021 = vadd.f32 %v857, %v1020
        %v1022 = vpop.f32.mrf.mxu0
        %1023 = vmatprep.mubr.bf16.mxu0 0
        %1024 = vmatmul.mubr.bf16.gmra.mxu0 %v930
        %v1025 = vpop.f32.mrf.mxu0
        %v1026 = vadd.f32 %v862, %v1025
        %v1027 = vpop.f32.mrf.mxu0
        %v1028 = vpop.f32.mrf.mxu0
        %v1029 = vadd.f32 %v865, %v1028
        %v1030 = vpop.f32.mrf.mxu0
        %1031 = vdwg.mxu0
        %v1032 = vld [vmem:[%s4] sm:$0x3]
        %v1049 = vunpack.c.l.b16 %v500
        %v1050 = vunpack.c.l.b16 %v501
        %v1051 = vunpack.c.l.b16 %v502
        %v1052 = vunpack.c.l.b16 %v503
        %v1053 = vunpack.c.l.b16 %v504
        %v1054 = vunpack.c.l.b16 %v505
        %v1055 = vunpack.c.l.b16 %v506
        %v1056 = vunpack.c.l.b16 %v507
        %v1057 = vunpack.c.l.b16 %v508
        %v1058 = vunpack.c.l.b16 %v509
        %v1059 = vunpack.c.l.b16 %v510
        %v1060 = vunpack.c.l.b16 %v511
        %v1061 = vunpack.c.l.b16 %v512
        %v1062 = vunpack.c.l.b16 %v513
        %v1063 = vunpack.c.l.b16 %v514
        %v1064 = vunpack.c.l.b16 %v515
        %v1065 = vpack.c.b16 %v1050, %v1049
        %v1066 = vpack.c.b16 %v1052, %v1051
        %v1067 = vpack.c.b16 %v1054, %v1053
        %v1068 = vpack.c.b16 %v1056, %v1055
        %v1069 = vpack.c.b16 %v1058, %v1057
        %v1070 = vpack.c.b16 %v1060, %v1059
        %v1071 = vpack.c.b16 %v1062, %v1061
        %v1072 = vpack.c.b16 %v1064, %v1063
        %v1074 = vsel %vm742, %v1065, 0
        %v1077 = vsel %vm742, %v1066, 0
        %v1080 = vsel %vm742, %v1067, 0
        %v1083 = vsel %vm742, %v1068, 0
        %v1086 = vsel %vm742, %v1069, 0
        %v1089 = vsel %vm742, %v1070, 0
        %v1092 = vsel %vm742, %v1071, 0
        %v1095 = vsel %vm742, %v1072, 0
        %v1098 = vsel %vm767, %v1032, 0
        %1100 = vmatprep.subr.bf16.mxu0 0
        %1101 = vmatpush1.bf16.msra.mxu0 0
        %1102 = vmatprep.subr.bf16.mxu0 0
        %1103 = vmatpush1.bf16.msra.mxu0 0
        %1104 = vmatprep.subr.bf16.mxu0 0
        %1105 = vmatpush1.bf16.msra.mxu0 0
        %1106 = vmatprep.subr.bf16.mxu0 0
        %1107 = vmatpush1.bf16.msra.mxu0 0
        %1108 = vmatprep.subr.bf16.mxu0 0
        %1109 = vmatpush1.bf16.msra.mxu0 0
        %1110 = vmatprep.subr.bf16.mxu0 0
        %1111 = vmatpush1.bf16.msra.mxu0 0
        %1112 = vmatprep.subr.bf16.mxu0 0
        %1113 = vmatpush1.bf16.msra.mxu0 0
        %1114 = vmatprep.subr.bf16.mxu0 0
        %1115 = vmatpush1.bf16.msra.mxu0 %v1098
        %1116 = vmatprep.subr.bf16.mxu0 0
        %1117 = vmatpush2.bf16.msra.mxu0 0
        %1118 = vmatprep.subr.bf16.mxu0 0
        %1119 = vmatpush2.bf16.msra.mxu0 0
        %1120 = vmatprep.subr.bf16.mxu0 0
        %1121 = vmatpush2.bf16.msra.mxu0 0
        %1122 = vmatprep.subr.bf16.mxu0 0
        %1123 = vmatpush2.bf16.msra.mxu0 0
        %1124 = vmatprep.subr.bf16.mxu0 0
        %1125 = vmatpush2.bf16.msra.mxu0 0
        %1126 = vmatprep.subr.bf16.mxu0 0
        %1127 = vmatpush2.bf16.msra.mxu0 0
        %1128 = vmatprep.subr.bf16.mxu0 0
        %1129 = vmatpush2.bf16.msra.mxu0 0
        %1130 = vmatprep.subr.bf16.mxu0 0
        %1131 = vmatpush2.bf16.msra.mxu0 0
        %1132 = vmatprep.mubr.bf16.mxu0 0
        %1133 = vmatmul.mubr.bf16.gmra.mxu0 %v1074
        %v1134 = vpop.f32.mrf.mxu0
        %v1135 = vadd.f32 0.0, %v1134
        %v1136 = vpop.f32.mrf.mxu0
        %v1137 = vpop.f32.mrf.mxu0
        %v1138 = vadd.f32 0.0, %v1137
        %v1139 = vpop.f32.mrf.mxu0
        %1140 = vmatprep.mubr.bf16.mxu0 0
        %1141 = vmatmul.mubr.bf16.gmra.mxu0 %v1077
        %v1142 = vpop.f32.mrf.mxu0
        %v1143 = vadd.f32 0.0, %v1142
        %v1144 = vpop.f32.mrf.mxu0
        %v1145 = vpop.f32.mrf.mxu0
        %v1146 = vadd.f32 0.0, %v1145
        %v1147 = vpop.f32.mrf.mxu0
        %1148 = vmatprep.mubr.bf16.mxu0 0
        %1149 = vmatmul.mubr.bf16.gmra.mxu0 %v1080
        %v1150 = vpop.f32.mrf.mxu0
        %v1151 = vadd.f32 0.0, %v1150
        %v1152 = vpop.f32.mrf.mxu0
        %v1153 = vpop.f32.mrf.mxu0
        %v1154 = vadd.f32 0.0, %v1153
        %v1155 = vpop.f32.mrf.mxu0
        %1156 = vmatprep.mubr.bf16.mxu0 0
        %1157 = vmatmul.mubr.bf16.gmra.mxu0 %v1083
        %v1158 = vpop.f32.mrf.mxu0
        %v1159 = vadd.f32 0.0, %v1158
        %v1160 = vpop.f32.mrf.mxu0
        %v1161 = vpop.f32.mrf.mxu0
        %v1162 = vadd.f32 0.0, %v1161
        %v1163 = vpop.f32.mrf.mxu0
        %1164 = vmatprep.mubr.bf16.mxu0 0
        %1165 = vmatmul.mubr.bf16.gmra.mxu0 %v1086
        %v1166 = vpop.f32.mrf.mxu0
        %v1167 = vadd.f32 0.0, %v1166
        %v1168 = vpop.f32.mrf.mxu0
        %v1169 = vpop.f32.mrf.mxu0
        %v1170 = vadd.f32 0.0, %v1169
        %v1171 = vpop.f32.mrf.mxu0
        %1172 = vmatprep.mubr.bf16.mxu0 0
        %1173 = vmatmul.mubr.bf16.gmra.mxu0 %v1089
        %v1174 = vpop.f32.mrf.mxu0
        %v1175 = vadd.f32 0.0, %v1174
        %v1176 = vpop.f32.mrf.mxu0
        %v1177 = vpop.f32.mrf.mxu0
        %v1178 = vadd.f32 0.0, %v1177
        %v1179 = vpop.f32.mrf.mxu0
        %1180 = vmatprep.mubr.bf16.mxu0 0
        %1181 = vmatmul.mubr.bf16.gmra.mxu0 %v1092
        %v1182 = vpop.f32.mrf.mxu0
        %v1183 = vadd.f32 0.0, %v1182
        %v1184 = vpop.f32.mrf.mxu0
        %v1185 = vpop.f32.mrf.mxu0
        %v1186 = vadd.f32 0.0, %v1185
        %v1187 = vpop.f32.mrf.mxu0
        %1188 = vmatprep.mubr.bf16.mxu0 0
        %1189 = vmatmul.mubr.bf16.gmra.mxu0 %v1095
        %v1190 = vpop.f32.mrf.mxu0
        %v1191 = vadd.f32 0.0, %v1190
        %v1192 = vpop.f32.mrf.mxu0
        %v1193 = vpop.f32.mrf.mxu0
        %v1194 = vadd.f32 0.0, %v1193
        %v1195 = vpop.f32.mrf.mxu0
        %1196 = vdwg.mxu0
        %v1197 = vadd.f32 %v970, %v1135
        %v1198 = vadd.f32 %v973, %v1138
        %v1199 = vadd.f32 %v978, %v1143
        %v1200 = vadd.f32 %v981, %v1146
        %v1201 = vadd.f32 %v986, %v1151
        %v1202 = vadd.f32 %v989, %v1154
        %v1203 = vadd.f32 %v994, %v1159
        %v1204 = vadd.f32 %v997, %v1162
        %v1205 = vadd.f32 %v1002, %v1167
        %v1206 = vadd.f32 %v1005, %v1170
        %v1207 = vadd.f32 %v1010, %v1175
        %v1208 = vadd.f32 %v1013, %v1178
        %v1209 = vadd.f32 %v1018, %v1183
        %v1210 = vadd.f32 %v1021, %v1186
        %v1211 = vadd.f32 %v1026, %v1191
        %v1212 = vadd.f32 %v1029, %v1194
        %v1213 = vld [vmem:[%s5] sm:$0x3]
        %v1214 = vunpack.c.l.b16 %v537
        %v1215 = vunpack.c.l.b16 %v547
        %v1216 = vunpack.c.l.b16 %v561
        %v1217 = vunpack.c.l.b16 %v571
        %v1218 = vunpack.c.l.b16 %v585
        %v1219 = vunpack.c.l.b16 %v595
        %v1220 = vunpack.c.l.b16 %v609
        %v1221 = vunpack.c.l.b16 %v619
        %v1222 = vunpack.c.l.b16 %v633
        %v1223 = vunpack.c.l.b16 %v643
        %v1224 = vunpack.c.l.b16 %v657
        %v1225 = vunpack.c.l.b16 %v667
        %v1226 = vunpack.c.l.b16 %v681
        %v1227 = vunpack.c.l.b16 %v691
        %v1228 = vunpack.c.l.b16 %v705
        %v1229 = vunpack.c.l.b16 %v715
        %v1230 = vpack.c.b16 %v1215, %v1214
        %v1231 = vpack.c.b16 %v1217, %v1216
        %v1232 = vpack.c.b16 %v1219, %v1218
        %v1233 = vpack.c.b16 %v1221, %v1220
        %v1234 = vpack.c.b16 %v1223, %v1222
        %v1235 = vpack.c.b16 %v1225, %v1224
        %v1236 = vpack.c.b16 %v1227, %v1226
        %v1237 = vpack.c.b16 %v1229, %v1228
        %v1239 = vsel %vm742, %v1230, 0
        %v1242 = vsel %vm742, %v1231, 0
        %v1245 = vsel %vm742, %v1232, 0
        %v1248 = vsel %vm742, %v1233, 0
        %v1251 = vsel %vm742, %v1234, 0
        %v1254 = vsel %vm742, %v1235, 0
        %v1257 = vsel %vm742, %v1236, 0
        %v1260 = vsel %vm742, %v1237, 0
        %v1263 = vsel %vm767, %v1213, 0
        %1265 = vmatprep.subr.bf16.mxu0 0
        %1266 = vmatpush1.bf16.msra.mxu0 0
        %1267 = vmatprep.subr.bf16.mxu0 0
        %1268 = vmatpush1.bf16.msra.mxu0 0
        %1269 = vmatprep.subr.bf16.mxu0 0
        %1270 = vmatpush1.bf16.msra.mxu0 0
        %1271 = vmatprep.subr.bf16.mxu0 0
        %1272 = vmatpush1.bf16.msra.mxu0 0
        %1273 = vmatprep.subr.bf16.mxu0 0
        %1274 = vmatpush1.bf16.msra.mxu0 0
        %1275 = vmatprep.subr.bf16.mxu0 0
        %1276 = vmatpush1.bf16.msra.mxu0 0
        %1277 = vmatprep.subr.bf16.mxu0 0
        %1278 = vmatpush1.bf16.msra.mxu0 0
        %1279 = vmatprep.subr.bf16.mxu0 0
        %1280 = vmatpush1.bf16.msra.mxu0 %v1263
        %1281 = vmatprep.subr.bf16.mxu0 0
        %1282 = vmatpush2.bf16.msra.mxu0 0
        %1283 = vmatprep.subr.bf16.mxu0 0
        %1284 = vmatpush2.bf16.msra.mxu0 0
        %1285 = vmatprep.subr.bf16.mxu0 0
        %1286 = vmatpush2.bf16.msra.mxu0 0
        %1287 = vmatprep.subr.bf16.mxu0 0
        %1288 = vmatpush2.bf16.msra.mxu0 0
        %1289 = vmatprep.subr.bf16.mxu0 0
        %1290 = vmatpush2.bf16.msra.mxu0 0
        %1291 = vmatprep.subr.bf16.mxu0 0
        %1292 = vmatpush2.bf16.msra.mxu0 0
        %1293 = vmatprep.subr.bf16.mxu0 0
        %1294 = vmatpush2.bf16.msra.mxu0 0
        %1295 = vmatprep.subr.bf16.mxu0 0
        %1296 = vmatpush2.bf16.msra.mxu0 0
        %1297 = vmatprep.mubr.bf16.mxu0 0
        %1298 = vmatmul.mubr.bf16.gmra.mxu0 %v1239
        %v1299 = vpop.f32.mrf.mxu0
        %v1300 = vadd.f32 0.0, %v1299
        %v1301 = vpop.f32.mrf.mxu0
        %v1302 = vpop.f32.mrf.mxu0
        %v1303 = vadd.f32 0.0, %v1302
        %v1304 = vpop.f32.mrf.mxu0
        %1305 = vmatprep.mubr.bf16.mxu0 0
        %1306 = vmatmul.mubr.bf16.gmra.mxu0 %v1242
        %v1307 = vpop.f32.mrf.mxu0
        %v1308 = vadd.f32 0.0, %v1307
        %v1309 = vpop.f32.mrf.mxu0
        %v1310 = vpop.f32.mrf.mxu0
        %v1311 = vadd.f32 0.0, %v1310
        %v1312 = vpop.f32.mrf.mxu0
        %1313 = vmatprep.mubr.bf16.mxu0 0
        %1314 = vmatmul.mubr.bf16.gmra.mxu0 %v1245
        %v1315 = vpop.f32.mrf.mxu0
        %v1316 = vadd.f32 0.0, %v1315
        %v1317 = vpop.f32.mrf.mxu0
        %v1318 = vpop.f32.mrf.mxu0
        %v1319 = vadd.f32 0.0, %v1318
        %v1320 = vpop.f32.mrf.mxu0
        %1321 = vmatprep.mubr.bf16.mxu0 0
        %1322 = vmatmul.mubr.bf16.gmra.mxu0 %v1248
        %v1323 = vpop.f32.mrf.mxu0
        %v1324 = vadd.f32 0.0, %v1323
        %v1325 = vpop.f32.mrf.mxu0
        %v1326 = vpop.f32.mrf.mxu0
        %v1327 = vadd.f32 0.0, %v1326
        %v1328 = vpop.f32.mrf.mxu0
        %1329 = vmatprep.mubr.bf16.mxu0 0
        %1330 = vmatmul.mubr.bf16.gmra.mxu0 %v1251
        %v1331 = vpop.f32.mrf.mxu0
        %v1332 = vadd.f32 0.0, %v1331
        %v1333 = vpop.f32.mrf.mxu0
        %v1334 = vpop.f32.mrf.mxu0
        %v1335 = vadd.f32 0.0, %v1334
        %v1336 = vpop.f32.mrf.mxu0
        %1337 = vmatprep.mubr.bf16.mxu0 0
        %1338 = vmatmul.mubr.bf16.gmra.mxu0 %v1254
        %v1339 = vpop.f32.mrf.mxu0
        %v1340 = vadd.f32 0.0, %v1339
        %v1341 = vpop.f32.mrf.mxu0
        %v1342 = vpop.f32.mrf.mxu0
        %v1343 = vadd.f32 0.0, %v1342
        %v1344 = vpop.f32.mrf.mxu0
        %1345 = vmatprep.mubr.bf16.mxu0 0
        %1346 = vmatmul.mubr.bf16.gmra.mxu0 %v1257
        %v1347 = vpop.f32.mrf.mxu0
        %v1348 = vadd.f32 0.0, %v1347
        %v1349 = vpop.f32.mrf.mxu0
        %v1350 = vpop.f32.mrf.mxu0
        %v1351 = vadd.f32 0.0, %v1350
        %v1352 = vpop.f32.mrf.mxu0
        %1353 = vmatprep.mubr.bf16.mxu0 0
        %1354 = vmatmul.mubr.bf16.gmra.mxu0 %v1260
        %v1355 = vpop.f32.mrf.mxu0
        %v1356 = vadd.f32 0.0, %v1355
        %v1357 = vpop.f32.mrf.mxu0
        %v1358 = vpop.f32.mrf.mxu0
        %v1359 = vadd.f32 0.0, %v1358
        %v1360 = vpop.f32.mrf.mxu0
        %1361 = vdwg.mxu0
        %v1362 = vadd.f32 %v1197, %v1300
        %v1363 = vadd.f32 %v1198, %v1303
        %v1364 = vadd.f32 %v1199, %v1308
        %v1365 = vadd.f32 %v1200, %v1311
        %v1366 = vadd.f32 %v1201, %v1316
        %v1367 = vadd.f32 %v1202, %v1319
        %v1368 = vadd.f32 %v1203, %v1324
        %v1369 = vadd.f32 %v1204, %v1327
        %v1370 = vadd.f32 %v1205, %v1332
        %v1371 = vadd.f32 %v1206, %v1335
        %v1372 = vadd.f32 %v1207, %v1340
        %v1373 = vadd.f32 %v1208, %v1343
        %v1374 = vadd.f32 %v1209, %v1348
        %v1375 = vadd.f32 %v1210, %v1351
        %v1376 = vadd.f32 %v1211, %v1356
        %v1377 = vadd.f32 %v1212, %v1359
        %vm1378 = vcmask 261120
        %v1379 = vsel %vm1378, %v1362, 0.0
        %v1380 = vsel %vm1378, %v1363, 0.0
        %v1381 = vadd.f32 %v1379, %v1380
        %v1382 = vsel %vm1378, %v1364, 0.0
        %v1383 = vadd.f32 %v1381, %v1382
        %v1384 = vsel %vm1378, %v1365, 0.0
        %v1385 = vadd.f32 %v1383, %v1384
        %v1386 = vsel %vm1378, %v1366, 0.0
        %v1387 = vadd.f32 %v1385, %v1386
        %v1388 = vsel %vm1378, %v1367, 0.0
        %v1389 = vadd.f32 %v1387, %v1388
        %v1390 = vsel %vm1378, %v1368, 0.0
        %v1391 = vadd.f32 %v1389, %v1390
        %v1392 = vsel %vm1378, %v1369, 0.0
        %v1393 = vadd.f32 %v1391, %v1392
        %v1394 = vsel %vm1378, %v1370, 0.0
        %v1395 = vadd.f32 %v1393, %v1394
        %v1396 = vsel %vm1378, %v1371, 0.0
        %v1397 = vadd.f32 %v1395, %v1396
        %v1398 = vsel %vm1378, %v1372, 0.0
        %v1399 = vadd.f32 %v1397, %v1398
        %v1400 = vsel %vm1378, %v1373, 0.0
        %v1401 = vadd.f32 %v1399, %v1400
        %v1402 = vsel %vm1378, %v1374, 0.0
        %v1403 = vadd.f32 %v1401, %v1402
        %v1404 = vsel %vm1378, %v1375, 0.0
        %v1405 = vadd.f32 %v1403, %v1404
        %v1406 = vsel %vm1378, %v1376, 0.0
        %v1407 = vadd.f32 %v1405, %v1406
        %v1408 = vsel %vm1378, %v1377, 0.0
        %v1409 = vadd.f32 %v1407, %v1408
        %v1410 = vrot.slane %v1409, 4
        %v1411 = vadd.f32 %v1409, %v1410
        %v1412 = vrot.slane %v1411, 2
        %v1413 = vadd.f32 %v1411, %v1412
        %v1414 = vrot.slane %v1413, 1
        %v1415 = vadd.f32 %v1413, %v1414
        %v1416 = vmul.f32 %v1415, 0.0078125
        %v1417 = vsub.f32 %v1362, %v1416
        %v1418 = vsub.f32 %v1363, %v1416
        %v1419 = vsub.f32 %v1364, %v1416
        %v1420 = vsub.f32 %v1365, %v1416
        %v1421 = vsub.f32 %v1366, %v1416
        %v1422 = vsub.f32 %v1367, %v1416
        %v1423 = vsub.f32 %v1368, %v1416
        %v1424 = vsub.f32 %v1369, %v1416
        %v1425 = vsub.f32 %v1370, %v1416
        %v1426 = vsub.f32 %v1371, %v1416
        %v1427 = vsub.f32 %v1372, %v1416
        %v1428 = vsub.f32 %v1373, %v1416
        %v1429 = vsub.f32 %v1374, %v1416
        %v1430 = vsub.f32 %v1375, %v1416
        %v1431 = vsub.f32 %v1376, %v1416
        %v1432 = vsub.f32 %v1377, %v1416
        %v1433 = vmul.f32 %v1417, %v1417
        %v1434 = vmul.f32 %v1418, %v1418
        %v1435 = vmul.f32 %v1419, %v1419
        %v1436 = vmul.f32 %v1420, %v1420
        %v1437 = vmul.f32 %v1421, %v1421
        %v1438 = vmul.f32 %v1422, %v1422
        %v1439 = vmul.f32 %v1423, %v1423
        %v1440 = vmul.f32 %v1424, %v1424
        %v1441 = vmul.f32 %v1425, %v1425
        %v1442 = vmul.f32 %v1426, %v1426
        %v1443 = vmul.f32 %v1427, %v1427
        %v1444 = vmul.f32 %v1428, %v1428
        %v1445 = vmul.f32 %v1429, %v1429
        %v1446 = vmul.f32 %v1430, %v1430
        %v1447 = vmul.f32 %v1431, %v1431
        %v1448 = vmul.f32 %v1432, %v1432
        %v1449 = vsel %vm1378, %v1433, 0.0
        %v1450 = vsel %vm1378, %v1434, 0.0
        %v1451 = vadd.f32 %v1449, %v1450
        %v1452 = vsel %vm1378, %v1435, 0.0
        %v1453 = vadd.f32 %v1451, %v1452
        %v1454 = vsel %vm1378, %v1436, 0.0
        %v1455 = vadd.f32 %v1453, %v1454
        %v1456 = vsel %vm1378, %v1437, 0.0
        %v1457 = vadd.f32 %v1455, %v1456
        %v1458 = vsel %vm1378, %v1438, 0.0
        %v1459 = vadd.f32 %v1457, %v1458
        %v1460 = vsel %vm1378, %v1439, 0.0
        %v1461 = vadd.f32 %v1459, %v1460
        %v1462 = vsel %vm1378, %v1440, 0.0
        %v1463 = vadd.f32 %v1461, %v1462
        %v1464 = vsel %vm1378, %v1441, 0.0
        %v1465 = vadd.f32 %v1463, %v1464
        %v1466 = vsel %vm1378, %v1442, 0.0
        %v1467 = vadd.f32 %v1465, %v1466
        %v1468 = vsel %vm1378, %v1443, 0.0
        %v1469 = vadd.f32 %v1467, %v1468
        %v1470 = vsel %vm1378, %v1444, 0.0
        %v1471 = vadd.f32 %v1469, %v1470
        %v1472 = vsel %vm1378, %v1445, 0.0
        %v1473 = vadd.f32 %v1471, %v1472
        %v1474 = vsel %vm1378, %v1446, 0.0
        %v1475 = vadd.f32 %v1473, %v1474
        %v1476 = vsel %vm1378, %v1447, 0.0
        %v1477 = vadd.f32 %v1475, %v1476
        %v1478 = vsel %vm1378, %v1448, 0.0
        %v1479 = vadd.f32 %v1477, %v1478
        %v1480 = vrot.slane %v1479, 4
        %v1481 = vadd.f32 %v1479, %v1480
        %v1482 = vrot.slane %v1481, 2
        %v1483 = vadd.f32 %v1481, %v1482
        %v1484 = vrot.slane %v1483, 1
        %v1485 = vadd.f32 %v1483, %v1484
        %1487 = vrot.lane.b32.xlu0 %v1485, 32
        %v1488 = vpop.permute.xlu0 %1487
        %v1490 = vsel %vm1378, %v1416, %v1488
        %v1491 = vlaneseq
        %v1492 = vshrl.u32 %v1491, 7
        %v1493 = vsub.s32 0, %v1492
        %v1494 = vrot.slane %v1490, %v1493
        %vm1495 = vcmask 523264
        %1496 = vst.msk [vmem:[%s265] sm:$0xff] %vm1495, %v1494
        %s1497 = sand.u32 %s164, 1
        %s1498 = scalar_lea.sflag [#allocation3], %s1497
        %s1499 = sand.u32 %s164, 1
        %s1500 = smul.addr %s1499, 8
        %s1501 = scalar_lea.vmem [#allocation2], %s1500
        // Predicated region
        $region45: #{tpu_custom_call.1} parent=43 // pred_check
          %p1502 = pneg %p174
        $region46: #{tpu_custom_call.1} parent=43 // pred_check_branch
          %1504 = sbr.rel (%p1502) target = $region48
        $region47: #{tpu_custom_call.1} parent=43 // pred_region
          %s1506 = ssub.s32 128, 128
          %1507 = vsyncadd %s1498, %s1506
          %s1508 = smul.addr %s20, 128
          %s1509 = scalar_lea.hbm %s6, %s1508
          %s1511 = sshll.u32 %s1501, 4
          %s1512 = int_to_ptr.vmem [resolvable:$true] %s1511
          %1514 = dma.vmem_to_hbm [thread:$0]  %s1512, 128, %s1509, %s1498
        $region48: #{tpu_custom_call.1} parent=43 // pred_fallthru
          _
      $region44: #{tpu_custom_call.1} parent=5 // pred_fallthru
        _
      %p1515 = scmp.le.s32.totalorder 2, %s15
      // Predicated region
      $region49: #{tpu_custom_call.1} parent=5 // pred_check
        %p1516 = pneg %p1515
      $region50: #{tpu_custom_call.1} parent=5 // pred_check_branch
        %1518 = sbr.rel (%p1516) target = $region52
      $region51: #{tpu_custom_call.1} parent=5 // pred_region
        %s1519 = ssub.s32 %s15, 2
        // Predicated region
        $region53: #{tpu_custom_call.1} parent=51 // pred_check
          %p1520 = pneg %p180
        $region54: #{tpu_custom_call.1} parent=51 // pred_check_branch
          %1522 = sbr.rel (%p1520) target = $region56
        $region55: #{tpu_custom_call.1} parent=51 // pred_region
          %s1523 = sand.u32 %s165, 1
          %s1524 = scalar_lea.sflag [#allocation3], %s1523
          %s1525 = sand.u32 %s165, 1
          %s1526 = smul.addr %s1525, 8
          %s1527 = scalar_lea.vmem [#allocation2], %s1526
          %1528 = dma.done %s1524, 128
        $region56: #{tpu_custom_call.1} parent=51 // pred_fallthru
          _
      $region52: #{tpu_custom_call.1} parent=5 // pred_fallthru
        _
    $region6: #{tpu_custom_call.1} parent=1 // loop_footer
      %s19 = sadd.s32 1, %s15
    $region7: #{tpu_custom_call.1} parent=1 // loop_footer_branch
      %14 = sbr.rel target = $region3
    $region8: #{tpu_custom_call.1} parent=1 // loop_exit
      _
    %1529 = vsyncpa [#allocation3], 1
    %s1530 = scalar_lea.sflag [#allocation3], 1
    %1531 = vsyncpa %s1530, 1

</llo_original>
